<compile_context>
chip_gen: v7x
topology: tpu7x:2x2x1
jax: 0.10.0
libtpu: 0.0.40
codegen_flags: <defaults>
</compile_context>

<pallas_src>
import functools

import jax
import jax.numpy as jnp
from jax import lax
from jax.experimental import pallas as pl
from jax.experimental.pallas import tpu as pltpu

_LANES = 128
_SUBLANES = 8
_ROW_ALIGN = 32        # legal second-minor tile for f32 / bf16 / int8 streams
_MAX_BLOCK_ROWS = 4096  # 4096 x 128 x 4 B = 2 MiB f32 per input block


def _round_up(x, m):
    return ((x + m - 1) // m) * m


def _focal_loss_kernel(l_ref, t_ref, out_ref, *, gamma, valid_in_last):
    i = pl.program_id(0)
    last = pl.num_programs(0) - 1

    l = l_ref[...].astype(jnp.float32)
    t = t_ref[...].astype(jnp.float32)

    def block_partial(lv, tv):
        # sigmoid(x) = 0.5 * (tanh(x/2) + 1): a single EUP push per vreg
        # (vs exp + reciprocal), identical math.
        p = 0.5 * (jnp.tanh(0.5 * lv) + 1.0)
        p = jnp.where(tv >= 0.5, p, 1.0 - p)
        logp = -jnp.log(jnp.clip(p, 1e-4, 1.0 - 1e-4))
        loss = logp * (1.0 - p) ** gamma  # static int gamma -> VPU multiplies
        rows, lanes = loss.shape
        # Reduce the block to one (8, 128) vreg-shaped partial: layout-preserving
        # reshape + plain VPU vreg adds (no cross-lane XLU work in steady state).
        return jnp.sum(loss.reshape(rows // _SUBLANES, _SUBLANES, lanes), axis=0)

    @pl.when(i != last)
    def _():
        # Steady-state steps: completely mask-free.
        out_ref[...] = block_partial(l, t)

    @pl.when(i == last)
    def _():
        # Last step: substitute sentinel values for out-of-range elements BEFORE
        # sigmoid/log.  logits=+100, targets=1  =>  p == 1.0 exactly in f32, so
        # (1 - p)**gamma == 0 and the masked elements contribute exactly zero
        # (and garbage in the tail can never create NaN/Inf).
        rows, lanes = l.shape
        rel = (lax.broadcasted_iota(jnp.int32, (rows, lanes), 0) * lanes
               + lax.broadcasted_iota(jnp.int32, (rows, lanes), 1))
        valid = rel < valid_in_last
        lm = jnp.where(valid, l, 100.0)
        tm = jnp.where(valid, t, 1.0)
        out_ref[...] = block_partial(lm, tm)


def focal_loss(logits, targets, gamma=2):
    if logits.shape != targets.shape:
        raise ValueError(
            "Target size ({}) must be the same as input size ({})".format(
                targets.shape, logits.shape
            )
        )

    n_valid = logits.size
    # Stream inputs in their native dtype (kernel upcasts); no wrapper-side cast.
    l_flat = jnp.ravel(logits)
    t_flat = jnp.ravel(targets)

    rows = pl.cdiv(n_valid, _LANES)
    pad = rows * _LANES - n_valid
    if pad:
        # Minimal (<128 element) pad only to make the lane-dense 2-D reshape
        # legal; values are irrelevant (the in-kernel last-block mask covers the
        # whole tail).  No block-granularity padding of the full arrays.
        l_flat = jnp.pad(l_flat, (0, pad))
        t_flat = jnp.pad(t_flat, (0, pad))

    l2d = l_flat.reshape(rows, _LANES)
    t2d = t_flat.reshape(rows, _LANES)

    # Block size: as large as possible (amortize per-step pipeline overhead)
    # while keeping >= 2 grid steps when the input allows it, so both v7x
    # TensorCores receive work under "parallel" semantics.
    block_rows = min(
        _MAX_BLOCK_ROWS,
        max(_ROW_ALIGN, _round_up(pl.cdiv(rows, 2), _ROW_ALIGN)),
    )
    num_blocks = pl.cdiv(rows, block_rows)
    # Number of valid elements inside the last block (static; never overflows).
    valid_in_last = n_valid - (num_blocks - 1) * block_rows * _LANES

    kernel = functools.partial(
        _focal_loss_kernel, gamma=gamma, valid_in_last=valid_in_last
    )

    partials = pl.pallas_call(
        kernel,
        out_shape=jax.ShapeDtypeStruct((num_blocks * _SUBLANES, _LANES), jnp.float32),
        grid_spec=pltpu.PrefetchScalarGridSpec(
            num_scalar_prefetch=0,
            grid=(num_blocks,),
            in_specs=[
                pl.BlockSpec((block_rows, _LANES), lambda i: (i, 0)),
                pl.BlockSpec((block_rows, _LANES), lambda i: (i, 0)),
            ],
            out_specs=pl.BlockSpec((_SUBLANES, _LANES), lambda i: (i, 0)),
        ),
        compiler_params=pltpu.CompilerParams(
            dimension_semantics=("parallel",),
            vmem_limit_bytes=32 * 1024 * 1024,
        ),
    )(l2d, t2d)

    # Tiny epilogue reduce + mean in plain JAX (partials are num_blocks x 8 x 128).
    return jnp.sum(partials) / jnp.float32(n_valid)


def focal_loss_ref(logits, targets, gamma=2):
    l = jnp.ravel(logits).astype(jnp.float32)
    t = jnp.ravel(targets).astype(jnp.float32)
    p = jax.nn.sigmoid(l)
    p = jnp.where(t >= 0.5, p, 1.0 - p)
    logp = -jnp.log(jnp.clip(p, 1e-4, 1.0 - 1e-4))
    return jnp.mean(logp * (1.0 - p) ** gamma)


if __name__ == "__main__":
    key = jax.random.PRNGKey(0)
    k1, k2, k3, k4, k5, k6 = jax.random.split(key, 6)

    # 1) NCHW example (batch=2, channels=4, spatial=16x16): 2048 elements —
    #    exactly lane-aligned, so the wrapper does ZERO padding / extra copies.
    logits = jax.random.normal(k1, (2, 4, 16, 16), dtype=jnp.float32)
    targets = (jax.random.uniform(k2, (2, 4, 16, 16)) > 0.5).astype(jnp.float32)
    out = focal_loss(logits, targets, gamma=2)
    jax.block_until_ready(out)
    ref = focal_loss_ref(logits, targets, gamma=2)
    assert jnp.allclose(out, ref, atol=1e-5, rtol=1e-5), (out, ref)

    # 2) Misaligned shape: exercises the minimal-pad + in-kernel last-block mask.
    logits2 = jax.random.normal(k3, (2, 3, 17, 13), dtype=jnp.float32)
    targets2 = (jax.random.uniform(k4, (2, 3, 17, 13)) > 0.5).astype(jnp.float32)
    out2 = focal_loss(logits2, targets2, gamma=2)
    jax.block_until_ready(out2)
    ref2 = focal_loss_ref(logits2, targets2, gamma=2)
    assert jnp.allclose(out2, ref2, atol=1e-5, rtol=1e-5), (out2, ref2)

    # 3) Narrow-dtype streaming + multi-block (parallel) path: bf16 logits.
    logits3 = jax.random.normal(k5, (4, 8, 32, 32), dtype=jnp.bfloat16)
    targets3 = (jax.random.uniform(k6, (4, 8, 32, 32)) > 0.5).astype(jnp.float32)
    out3 = focal_loss(logits3, targets3, gamma=2)
    jax.block_until_ready(out3)
    ref3 = focal_loss_ref(logits3, targets3, gamma=2)
    assert jnp.allclose(out3, ref3, atol=1e-5, rtol=1e-5), (out3, ref3)

    print("KERNEL_OK")
</pallas_src>

<mosaic_0001>
module attributes {stable_mosaic.version = 11 : i64} {
  func.func @_focal_loss_kernel(%arg0: i32, %arg1: memref<32x128xf32, #tpu.memory_space<vmem>>, %arg2: memref<32x128xf32, #tpu.memory_space<vmem>>, %arg3: memref<8x128xf32, #tpu.memory_space<vmem>>) attributes {dimension_semantics = [#tpu.dimension_semantics<parallel>], iteration_bounds = array<i64: 1>, scalar_prefetch = 0 : i64, scratch_operands = 0 : i64, tpu.core_type = #tpu.core_type<tc>, window_params = [{transform_indices = @transform_0, window_bounds = array<i64: 32, 128>}, {transform_indices = @transform_1, window_bounds = array<i64: 32, 128>}, {transform_indices = @transform_2, window_bounds = array<i64: 8, 128>}]} {
    %c0 = arith.constant 0 : index
    %c0_0 = arith.constant 0 : index
    %0 = vector.load %arg1[%c0, %c0_0] : memref<32x128xf32, #tpu.memory_space<vmem>>, vector<32x128xf32>
    %c0_1 = arith.constant 0 : index
    %c0_2 = arith.constant 0 : index
    %1 = vector.load %arg2[%c0_1, %c0_2] : memref<32x128xf32, #tpu.memory_space<vmem>>, vector<32x128xf32>
    %c0_i32 = arith.constant 0 : i32
    %2 = arith.cmpi ne, %arg0, %c0_i32 : i32
    %3 = arith.extui %2 : i1 to i32
    %c0_i32_3 = arith.constant 0 : i32
    %4 = arith.cmpi ne, %3, %c0_i32_3 : i32
    scf.if %4 {
      %cst = arith.constant 5.000000e-01 : f32
      %8 = vector.broadcast %cst : f32 to vector<32x128xf32>
      %9 = arith.mulf %8, %0 : vector<32x128xf32>
      %10 = math.tanh %9 : vector<32x128xf32>
      %cst_6 = arith.constant 1.000000e+00 : f32
      %11 = vector.broadcast %cst_6 : f32 to vector<32x128xf32>
      %12 = arith.addf %10, %11 : vector<32x128xf32>
      %cst_7 = arith.constant 5.000000e-01 : f32
      %13 = vector.broadcast %cst_7 : f32 to vector<32x128xf32>
      %14 = arith.mulf %13, %12 : vector<32x128xf32>
      %cst_8 = arith.constant 5.000000e-01 : f32
      %15 = vector.broadcast %cst_8 : f32 to vector<32x128xf32>
      %16 = arith.cmpf oge, %1, %15 : vector<32x128xf32>
      %cst_9 = arith.constant 1.000000e+00 : f32
      %17 = vector.broadcast %cst_9 : f32 to vector<32x128xf32>
      %18 = arith.subf %17, %14 : vector<32x128xf32>
      %19 = arith.select %16, %14, %18 : vector<32x128xi1>, vector<32x128xf32>
      %cst_10 = arith.constant 9.99999974E-5 : f32
      %cst_11 = arith.constant 0.999899983 : f32
      %20 = vector.broadcast %cst_10 : f32 to vector<32x128xf32>
      %21 = arith.maximumf %20, %19 : vector<32x128xf32>
      %22 = vector.broadcast %cst_11 : f32 to vector<32x128xf32>
      %23 = arith.minimumf %22, %21 : vector<32x128xf32>
      %24 = math.log %23 : vector<32x128xf32>
      %cst_12 = arith.constant 0.000000e+00 : f32
      %25 = vector.broadcast %cst_12 : f32 to vector<32x128xf32>
      %26 = arith.subf %25, %24 : vector<32x128xf32>
      %cst_13 = arith.constant 1.000000e+00 : f32
      %27 = vector.broadcast %cst_13 : f32 to vector<32x128xf32>
      %28 = arith.subf %27, %19 : vector<32x128xf32>
      %29 = arith.mulf %28, %28 : vector<32x128xf32>
      %30 = arith.mulf %26, %29 : vector<32x128xf32>
      %31 = vector.shape_cast %30 : vector<32x128xf32> to vector<4x8x128xf32>
      %cst_14 = arith.constant dense<0.000000e+00> : vector<8x128xf32>
      %32 = vector.multi_reduction <add>, %31, %cst_14 [0] : vector<4x8x128xf32> to vector<8x128xf32>
      %c0_15 = arith.constant 0 : index
      %c0_16 = arith.constant 0 : index
      %33 = vector.load %arg3[%c0_15, %c0_16] : memref<8x128xf32, #tpu.memory_space<vmem>>, vector<8x128xf32>
      tpu.vector_store %arg3[%c0_15, %c0_16], %32 {strides = array<i32>} : memref<8x128xf32, #tpu.memory_space<vmem>>, vector<8x128xf32>,
    } else {
    }
    %c0_i32_4 = arith.constant 0 : i32
    %5 = arith.cmpi eq, %arg0, %c0_i32_4 : i32
    %6 = arith.extui %5 : i1 to i32
    %c0_i32_5 = arith.constant 0 : i32
    %7 = arith.cmpi ne, %6, %c0_i32_5 : i32
    scf.if %7 {
      %8 = tpu.iota {dimensions = array<i32: 0>} : vector<32x128xi32>
      %c128_i32 = arith.constant 128 : i32
      %9 = vector.broadcast %c128_i32 : i32 to vector<32x128xi32>
      %10 = arith.muli %8, %9 : vector<32x128xi32>
      %11 = tpu.iota {dimensions = array<i32: 1>} : vector<32x128xi32>
      %12 = arith.addi %10, %11 : vector<32x128xi32>
      %c2048_i32 = arith.constant 2048 : i32
      %13 = vector.broadcast %c2048_i32 : i32 to vector<32x128xi32>
      %14 = arith.cmpi slt, %12, %13 : vector<32x128xi32>
      %cst = arith.constant 1.000000e+02 : f32
      %15 = vector.broadcast %cst : f32 to vector<32x128xf32>
      %16 = arith.select %14, %0, %15 : vector<32x128xi1>, vector<32x128xf32>
      %cst_6 = arith.constant 1.000000e+00 : f32
      %17 = vector.broadcast %cst_6 : f32 to vector<32x128xf32>
      %18 = arith.select %14, %1, %17 : vector<32x128xi1>, vector<32x128xf32>
      %cst_7 = arith.constant 5.000000e-01 : f32
      %19 = vector.broadcast %cst_7 : f32 to vector<32x128xf32>
      %20 = arith.mulf %19, %16 : vector<32x128xf32>
      %21 = math.tanh %20 : vector<32x128xf32>
      %cst_8 = arith.constant 1.000000e+00 : f32
      %22 = vector.broadcast %cst_8 : f32 to vector<32x128xf32>
      %23 = arith.addf %21, %22 : vector<32x128xf32>
      %cst_9 = arith.constant 5.000000e-01 : f32
      %24 = vector.broadcast %cst_9 : f32 to vector<32x128xf32>
      %25 = arith.mulf %24, %23 : vector<32x128xf32>
      %cst_10 = arith.constant 5.000000e-01 : f32
      %26 = vector.broadcast %cst_10 : f32 to vector<32x128xf32>
      %27 = arith.cmpf oge, %18, %26 : vector<32x128xf32>
      %cst_11 = arith.constant 1.000000e+00 : f32
      %28 = vector.broadcast %cst_11 : f32 to vector<32x128xf32>
      %29 = arith.subf %28, %25 : vector<32x128xf32>
      %30 = arith.select %27, %25, %29 : vector<32x128xi1>, vector<32x128xf32>
      %cst_12 = arith.constant 9.99999974E-5 : f32
      %cst_13 = arith.constant 0.999899983 : f32
      %31 = vector.broadcast %cst_12 : f32 to vector<32x128xf32>
      %32 = arith.maximumf %31, %30 : vector<32x128xf32>
      %33 = vector.broadcast %cst_13 : f32 to vector<32x128xf32>
      %34 = arith.minimumf %33, %32 : vector<32x128xf32>
      %35 = math.log %34 : vector<32x128xf32>
      %cst_14 = arith.constant 0.000000e+00 : f32
      %36 = vector.broadcast %cst_14 : f32 to vector<32x128xf32>
      %37 = arith.subf %36, %35 : vector<32x128xf32>
      %cst_15 = arith.constant 1.000000e+00 : f32
      %38 = vector.broadcast %cst_15 : f32 to vector<32x128xf32>
      %39 = arith.subf %38, %30 : vector<32x128xf32>
      %40 = arith.mulf %39, %39 : vector<32x128xf32>
      %41 = arith.mulf %37, %40 : vector<32x128xf32>
      %42 = vector.shape_cast %41 : vector<32x128xf32> to vector<4x8x128xf32>
      %cst_16 = arith.constant dense<0.000000e+00> : vector<8x128xf32>
      %43 = vector.multi_reduction <add>, %42, %cst_16 [0] : vector<4x8x128xf32> to vector<8x128xf32>
      %c0_17 = arith.constant 0 : index
      %c0_18 = arith.constant 0 : index
      %44 = vector.load %arg3[%c0_17, %c0_18] : memref<8x128xf32, #tpu.memory_space<vmem>>, vector<8x128xf32>
      tpu.vector_store %arg3[%c0_17, %c0_18], %43 {strides = array<i32>} : memref<8x128xf32, #tpu.memory_space<vmem>>, vector<8x128xf32>,
    } else {
    }
    return
  }
  func.func @transform_0(%arg0: i32) -> (i32, i32) {
    %c0_i32 = arith.constant 0 : i32
    %c0_i32_0 = arith.constant 0 : i32
    return %arg0, %c0_i32 : i32, i32
  }
  func.func @transform_1(%arg0: i32) -> (i32, i32) {
    %c0_i32 = arith.constant 0 : i32
    %c0_i32_0 = arith.constant 0 : i32
    return %arg0, %c0_i32 : i32, i32
  }
  func.func @transform_2(%arg0: i32) -> (i32, i32) {
    %c0_i32 = arith.constant 0 : i32
    %c0_i32_0 = arith.constant 0 : i32
    return %arg0, %c0_i32 : i32, i32
  }
}

</mosaic_0001>

<llo_original>
// kernel: tpu_custom_call.1
$region0: #{tpu_custom_call.1}
  #allocation0 [shape = 'u32[]', space=smem, size = 0x4, offset = 0x4, fixed_abs, tag = 'smem constant byte address 0x4 - core index']
  #allocation1 [shape = 'u32[144,128]{1,0:T(1,128)}', space=vmem, size = 0x12000, scoped, tag = 'internal scratch']
  %s0 = inlined_call_operand.hbm [shape: f32[16,128], index: 0, kind: input, shape index: {}]
  %s1 = inlined_call_operand.hbm [shape: f32[16,128], index: 1, kind: input, shape index: {}]
  %s2 = inlined_call_operand.hbm [shape: f32[8,128], index: 2, kind: output, shape index: {}]
  %s3 = sld [smem:[#allocation0]]
  $region34: #{tpu_custom_call.1} parent=0
    _
  %s5 = ssub.s32 1, %s3
  %s6 = scalar_select 0, %s5, %s3
  $region1: #{tpu_custom_call.1} parent=0
    #allocation2 [shape = 'u8[16384]{0}', space=vmem, size = 0x4000, scoped, tag = 'input window, operand 0, single buffered']
    #allocation3 [shape = 's32[1]{0}', space=sflag, size = 0x4, scoped, tag = 'scoped memory for tpu_custom_call.1']
    #allocation4 [shape = 's32[1]{0}', space=sflag, size = 0x4, scoped, tag = 'scoped memory for tpu_custom_call.1']
    #allocation5 [shape = 'u8[16384]{0}', space=vmem, size = 0x4000, scoped, tag = 'input window, operand 1, single buffered']
    #allocation6 [shape = 's32[1]{0}', space=sflag, size = 0x4, scoped, tag = 'scoped memory for tpu_custom_call.1']
    #allocation7 [shape = 'u8[4096]{0}', space=vmem, size = 0x1000, scoped, tag = 'output window, operand 0, single buffered']
    %7 = vsyncpa [#allocation3], 0
    %8 = vsyncpa [#allocation6], 0
    %9 = vsyncpa [#allocation4], 0
    // Predicated region
    $region2: #{tpu_custom_call.1} parent=1 // pred_check
      _
    $region3: #{tpu_custom_call.1} parent=1 // pred_check_branch
      %11 = sbr.rel (0) target = $region5
    $region4: #{tpu_custom_call.1} parent=1 // pred_region
      %s13 = ssub.s32 512, 256
      %14 = vsyncadd [#allocation3], %s13
      %s15 = sshll.u32 [#allocation2], 4
      %s16 = int_to_ptr.vmem [resolvable:$true] %s15
      %21 = dma.hbm_to_vmem [thread:$0]  %s0, 256, %s16, [#allocation3], 128, 128, 8
    $region5: #{tpu_custom_call.1} parent=1 // pred_fallthru
      _
    // Predicated region
    $region6: #{tpu_custom_call.1} parent=1 // pred_check
      _
    $region7: #{tpu_custom_call.1} parent=1 // pred_check_branch
      %23 = sbr.rel (0) target = $region9
    $region8: #{tpu_custom_call.1} parent=1 // pred_region
      %s25 = ssub.s32 512, 256
      %26 = vsyncadd [#allocation6], %s25
      %s27 = sshll.u32 [#allocation5], 4
      %s28 = int_to_ptr.vmem [resolvable:$true] %s27
      %33 = dma.hbm_to_vmem [thread:$0]  %s1, 256, %s28, [#allocation6], 128, 128, 8
    $region9: #{tpu_custom_call.1} parent=1 // pred_fallthru
      _
    // Predicated region
    $region10: #{tpu_custom_call.1} parent=1 // pred_check
      _
    $region11: #{tpu_custom_call.1} parent=1 // pred_check_branch
      %35 = sbr.rel (0) target = $region13
    $region12: #{tpu_custom_call.1} parent=1 // pred_region
      %36 = dma.done [#allocation3], 512
    $region13: #{tpu_custom_call.1} parent=1 // pred_fallthru
      _
    // Predicated region
    $region14: #{tpu_custom_call.1} parent=1 // pred_check
      _
    $region15: #{tpu_custom_call.1} parent=1 // pred_check_branch
      %38 = sbr.rel (0) target = $region17
    $region16: #{tpu_custom_call.1} parent=1 // pred_region
      %39 = dma.done [#allocation6], 512
    $region17: #{tpu_custom_call.1} parent=1 // pred_fallthru
      _
    %v40 = vld [vmem:[#allocation2] sm:$0xff]
    %v41 = vld [vmem:[#allocation2 + $0x8] sm:$0xff]
    %v42 = vld [vmem:[#allocation2 + $0x10] sm:$0xff]
    %v43 = vld [vmem:[#allocation2 + $0x18] sm:$0xff]
    %v44 = vld [vmem:[#allocation5] sm:$0xff]
    %v45 = vld [vmem:[#allocation5 + $0x8] sm:$0xff]
    %v46 = vld [vmem:[#allocation5 + $0x10] sm:$0xff]
    %v47 = vld [vmem:[#allocation5 + $0x18] sm:$0xff]
    %p48 = scmp.ne.s32.totalorder 0, 0
    // Predicated region
    $region18: #{tpu_custom_call.1} parent=1 // pred_check
      %p49 = pneg %p48
    $region19: #{tpu_custom_call.1} parent=1 // pred_check_branch
      %51 = sbr.rel (%p49) target = $region21
    $region20: #{tpu_custom_call.1} parent=1 // pred_region
      %v52 = vmul.f32 %v40, 0.5
      %v53 = vmul.f32 %v41, 0.5
      %v54 = vmul.f32 %v42, 0.5
      %v55 = vmul.f32 %v43, 0.5
      %v56 = vtanh.pop %v52
      %v57 = vtanh.pop %v53
      %v58 = vtanh.pop %v54
      %v59 = vtanh.pop %v55
      %v60 = vadd.f32 %v56, 1.0
      %v61 = vadd.f32 %v57, 1.0
      %v62 = vadd.f32 %v58, 1.0
      %v63 = vadd.f32 %v59, 1.0
      %v64 = vmul.f32 %v60, 0.5
      %v65 = vmul.f32 %v61, 0.5
      %v66 = vmul.f32 %v62, 0.5
      %v67 = vmul.f32 %v63, 0.5
      %vm68 = vcmp.ge.f32.partialorder %v44, 0.5
      %vm69 = vcmp.ge.f32.partialorder %v45, 0.5
      %vm70 = vcmp.ge.f32.partialorder %v46, 0.5
      %vm71 = vcmp.ge.f32.partialorder %v47, 0.5
      %v72 = vsub.f32 1.0, %v64
      %v73 = vsub.f32 1.0, %v65
      %v74 = vsub.f32 1.0, %v66
      %v75 = vsub.f32 1.0, %v67
      %v76 = vsel %vm68, %v64, %v72
      %v77 = vsel %vm69, %v65, %v73
      %v78 = vsel %vm70, %v66, %v74
      %v79 = vsel %vm71, %v67, %v75
      %v80 = vmax.f32 %v76, 0.0001
      %v81 = vmax.f32 %v77, 0.0001
      %v82 = vmax.f32 %v78, 0.0001
      %v83 = vmax.f32 %v79, 0.0001
      %v84 = vmin.f32 %v80, 0.9999
      %v85 = vmin.f32 %v81, 0.9999
      %v86 = vmin.f32 %v82, 0.9999
      %v87 = vmin.f32 %v83, 0.9999
      %v88 = vlog2.pop %v84
      %v89 = vmul.f32 %v88, 0.6931472
      %v90 = vlog2.pop %v85
      %v91 = vmul.f32 %v90, 0.6931472
      %v92 = vlog2.pop %v86
      %v93 = vmul.f32 %v92, 0.6931472
      %v94 = vlog2.pop %v87
      %v95 = vmul.f32 %v94, 0.6931472
      %v96 = vsub.f32 0.0, %v89
      %v97 = vsub.f32 0.0, %v91
      %v98 = vsub.f32 0.0, %v93
      %v99 = vsub.f32 0.0, %v95
      %v100 = vsub.f32 1.0, %v76
      %v101 = vsub.f32 1.0, %v77
      %v102 = vsub.f32 1.0, %v78
      %v103 = vsub.f32 1.0, %v79
      %v104 = vmul.f32 %v100, %v100
      %v105 = vmul.f32 %v101, %v101
      %v106 = vmul.f32 %v102, %v102
      %v107 = vmul.f32 %v103, %v103
      %v108 = vmul.f32 %v96, %v104
      %v109 = vmul.f32 %v97, %v105
      %v110 = vmul.f32 %v98, %v106
      %v111 = vmul.f32 %v99, %v107
      %v112 = vadd.f32 %v108, %v109
      %v113 = vadd.f32 %v112, %v110
      %v114 = vadd.f32 %v113, %v111
      %115 = vst [vmem:[#allocation7] sm:$0xff] %v114
    $region21: #{tpu_custom_call.1} parent=1 // pred_fallthru
      _
    %p116 = scmp.eq.s32.totalorder 0, 0
    // Predicated region
    $region22: #{tpu_custom_call.1} parent=1 // pred_check
      %p117 = pneg %p116
    $region23: #{tpu_custom_call.1} parent=1 // pred_check_branch
      %119 = sbr.rel (%p117) target = $region25
    $region24: #{tpu_custom_call.1} parent=1 // pred_region
      %v120 = vlaneseq
      %v121 = vshrl.u32 %v120, 7
      %v122 = vadd.s32 %v121, 8
      %v123 = vadd.s32 %v121, 16
      %v124 = vadd.s32 %v121, 24
      %v125 = vmul.u32 %v121, 128
      %v126 = vmul.u32 %v122, 128
      %v127 = vmul.u32 %v123, 128
      %v128 = vmul.u32 %v124, 128
      %v129 = vlaneseq
      %v130 = vand.u32 %v129, 127
      %v131 = vadd.s32 %v125, %v130
      %v132 = vadd.s32 %v126, %v130
      %v133 = vadd.s32 %v127, %v130
      %v134 = vadd.s32 %v128, %v130
      %vm135 = vcmp.lt.s32.totalorder %v131, 2048
      %vm136 = vcmp.lt.s32.totalorder %v132, 2048
      %vm137 = vcmp.lt.s32.totalorder %v133, 2048
      %vm138 = vcmp.lt.s32.totalorder %v134, 2048
      %v139 = vsel %vm135, %v40, 100.0
      %v140 = vsel %vm136, %v41, 100.0
      %v141 = vsel %vm137, %v42, 100.0
      %v142 = vsel %vm138, %v43, 100.0
      %v143 = vsel %vm135, %v44, 1.0
      %v144 = vsel %vm136, %v45, 1.0
      %v145 = vsel %vm137, %v46, 1.0
      %v146 = vsel %vm138, %v47, 1.0
      %v147 = vmul.f32 %v139, 0.5
      %v148 = vmul.f32 %v140, 0.5
      %v149 = vmul.f32 %v141, 0.5
      %v150 = vmul.f32 %v142, 0.5
      %v151 = vtanh.pop %v147
      %v152 = vtanh.pop %v148
      %v153 = vtanh.pop %v149
      %v154 = vtanh.pop %v150
      %v155 = vadd.f32 %v151, 1.0
      %v156 = vadd.f32 %v152, 1.0
      %v157 = vadd.f32 %v153, 1.0
      %v158 = vadd.f32 %v154, 1.0
      %v159 = vmul.f32 %v155, 0.5
      %v160 = vmul.f32 %v156, 0.5
      %v161 = vmul.f32 %v157, 0.5
      %v162 = vmul.f32 %v158, 0.5
      %vm163 = vcmp.ge.f32.partialorder %v143, 0.5
      %vm164 = vcmp.ge.f32.partialorder %v144, 0.5
      %vm165 = vcmp.ge.f32.partialorder %v145, 0.5
      %vm166 = vcmp.ge.f32.partialorder %v146, 0.5
      %v167 = vsub.f32 1.0, %v159
      %v168 = vsub.f32 1.0, %v160
      %v169 = vsub.f32 1.0, %v161
      %v170 = vsub.f32 1.0, %v162
      %v171 = vsel %vm163, %v159, %v167
      %v172 = vsel %vm164, %v160, %v168
      %v173 = vsel %vm165, %v161, %v169
      %v174 = vsel %vm166, %v162, %v170
      %v175 = vmax.f32 %v171, 0.0001
      %v176 = vmax.f32 %v172, 0.0001
      %v177 = vmax.f32 %v173, 0.0001
      %v178 = vmax.f32 %v174, 0.0001
      %v179 = vmin.f32 %v175, 0.9999
      %v180 = vmin.f32 %v176, 0.9999
      %v181 = vmin.f32 %v177, 0.9999
      %v182 = vmin.f32 %v178, 0.9999
      %v183 = vlog2.pop %v179
      %v184 = vmul.f32 %v183, 0.6931472
      %v185 = vlog2.pop %v180
      %v186 = vmul.f32 %v185, 0.6931472
      %v187 = vlog2.pop %v181
      %v188 = vmul.f32 %v187, 0.6931472
      %v189 = vlog2.pop %v182
      %v190 = vmul.f32 %v189, 0.6931472
      %v191 = vsub.f32 0.0, %v184
      %v192 = vsub.f32 0.0, %v186
      %v193 = vsub.f32 0.0, %v188
      %v194 = vsub.f32 0.0, %v190
      %v195 = vsub.f32 1.0, %v171
      %v196 = vsub.f32 1.0, %v172
      %v197 = vsub.f32 1.0, %v173
      %v198 = vsub.f32 1.0, %v174
      %v199 = vmul.f32 %v195, %v195
      %v200 = vmul.f32 %v196, %v196
      %v201 = vmul.f32 %v197, %v197
      %v202 = vmul.f32 %v198, %v198
      %v203 = vmul.f32 %v191, %v199
      %v204 = vmul.f32 %v192, %v200
      %v205 = vmul.f32 %v193, %v201
      %v206 = vmul.f32 %v194, %v202
      %v207 = vadd.f32 %v203, %v204
      %v208 = vadd.f32 %v207, %v205
      %v209 = vadd.f32 %v208, %v206
      %210 = vst [vmem:[#allocation7] sm:$0xff] %v209
    $region25: #{tpu_custom_call.1} parent=1 // pred_fallthru
      _
    // Predicated region
    $region26: #{tpu_custom_call.1} parent=1 // pred_check
      _
    $region27: #{tpu_custom_call.1} parent=1 // pred_check_branch
      %212 = sbr.rel (0) target = $region29
    $region28: #{tpu_custom_call.1} parent=1 // pred_region
      %s214 = ssub.s32 128, 128
      %215 = vsyncadd [#allocation4], %s214
      %s217 = sshll.u32 [#allocation7], 4
      %s218 = int_to_ptr.vmem [resolvable:$true] %s217
      %220 = dma.vmem_to_hbm [thread:$0]  %s218, 128, %s2, [#allocation4]
    $region29: #{tpu_custom_call.1} parent=1 // pred_fallthru
      _
    // Predicated region
    $region30: #{tpu_custom_call.1} parent=1 // pred_check
      _
    $region31: #{tpu_custom_call.1} parent=1 // pred_check_branch
      %222 = sbr.rel (0) target = $region33
    $region32: #{tpu_custom_call.1} parent=1 // pred_region
      %223 = dma.done [#allocation4], 128
    $region33: #{tpu_custom_call.1} parent=1 // pred_fallthru
      _
    %224 = vsyncpa [#allocation3], 1
    %225 = vsyncpa [#allocation6], 1
    %226 = vsyncpa [#allocation4], 1

</llo_original>
